<compile_context>
chip_gen: v7x
topology: tpu7x:2x2x1
jax: 0.10.0
libtpu: 0.0.40
codegen_flags: <defaults>
</compile_context>

<pallas_src>
import functools

import jax
import jax.numpy as jnp
from jax.experimental import pallas as pl
from jax.experimental.pallas import tpu as pltpu

LANE = 128
SUBLANE = 8


def _focal_kernel(p_ref, t_ref, out_ref, *, alpha, gamma, tile_rows,
                  blocks_per_core, valid_rows, needs_mask, binary_targets):
    c = pl.program_id(0)   # core (parallel) axis
    i = pl.program_id(1)   # row-block (accumulation) axis

    @pl.when(i == 0)
    def _():
        out_ref[...] = jnp.zeros_like(out_ref)

    p = p_ref[...].astype(jnp.float32)
    t = t_ref[...].astype(jnp.float32)

    if needs_mask:
        # Rows beyond the logical extent (partial / duplicated last block) are
        # forced to the zero-loss point (p=1, t=1) *before* the logs so that
        # garbage / NaN out-of-bounds data can never leak into the sum.
        # Row-only compare on a (tile_rows, 1) column; broadcasts over lanes.
        logical_block = c * blocks_per_core + i
        row0 = logical_block * tile_rows
        row_iota = jax.lax.broadcasted_iota(jnp.int32, (tile_rows, 1), 0)
        in_bounds = (row0 + row_iota) < valid_rows          # (tile_rows, 1)
        p = jnp.where(in_bounds, p, 1.0)
        t = jnp.where(in_bounds, t, 1.0)

    if binary_targets:
        # Fast path, exact for t in {0, 1}:
        #   q   = t*p + (1-t)*(1-p)           (prob. of the true class)
        #   BCE = -max(log(q), -100)          (PyTorch's internal log clamp)
        #   pt  = exp(-BCE) == q              (up to a sub-denormal e^-100 clamp,
        #                                      which is numerically irrelevant)
        # One EUP transcendental per element instead of three.
        q = jnp.where(t == 1.0, p, 1.0 - p)
        bce = -jnp.maximum(jnp.log(q), -100.0)
        pt = q
    else:
        # General (soft-target) path: PyTorch binary_cross_entropy semantics.
        # NOTE: torch uses log1p(-x) for the (1-x) term; jnp.log(1-p) can differ
        # only for p -> 0 where that element's focal contribution is O(p^3).
        log_p = jnp.maximum(jnp.log(p), -100.0)
        log_1mp = jnp.maximum(jnp.log(1.0 - p), -100.0)
        bce = -(t * log_p + (1.0 - t) * log_1mp)
        pt = jnp.exp(-bce)

    om = 1.0 - pt
    if float(gamma) == 2.0:
        focal_w = om * om              # VPU multiply instead of pow (2 EUP ops)
    elif float(gamma) == 1.0:
        focal_w = om
    else:
        focal_w = om ** gamma
    f_loss = focal_w * bce
    if float(alpha) != 1.0:
        f_loss = alpha * f_loss

    # Reduce only along the sublane-group axis (pure VPU adds, no XLU) into the
    # resident per-core (8, 128) partial-sum block.
    partial = f_loss.reshape(tile_rows // SUBLANE, SUBLANE, LANE).sum(axis=0)
    out_ref[...] += partial


def _slab_dtype(dt):
    """Keep bf16 streams as bf16 (halves HBM bytes); everything else -> f32."""
    return jnp.bfloat16 if jnp.dtype(dt) == jnp.dtype(jnp.bfloat16) else jnp.float32


def _slab(x, pad, dtype):
    x = x.reshape(-1).astype(dtype)
    if pad:
        # (p=1, t=1) -> BCE = 0, pt = 1, focal term = 0 (no contribution).
        x = jnp.concatenate([x, jnp.ones((pad,), dtype)])
    return x.reshape(-1, LANE)


def _tpu_defaults():
    """Return (tensorcores_per_device, vmem_capacity_bytes_or_None)."""
    vmem_cap = None
    try:
        vmem_cap = int(pltpu.get_tpu_info().vmem_capacity_bytes)
    except Exception:
        vmem_cap = None
    kind = ""
    try:
        kind = jax.devices()[0].device_kind.lower()
    except Exception:
        kind = ""
    # Single-TensorCore-per-device generations (v5e/v6e; on v2/v3 each JAX
    # device already is a single core).  v4/v5p (megacore) and v7x expose two
    # TensorCores per device and benefit from the 2-way "parallel" core axis.
    single_tc = any(s in kind for s in
                    ("v2", "v3", "v5e", "v5 lite", "v5lite", "v6e", "v6 lite", "v6lite"))
    return (1 if single_tc else 2), vmem_cap


def focal_loss(inputs, targets, alpha=1.0, gamma=2.0, *,
               binary_targets=False, tile_rows_cap=8192):
    """Pallas focal loss. `inputs` are probabilities in [0,1], same shape as targets.

    Set `binary_targets=True` only when every target is exactly 0 or 1; it
    enables the 1-transcendental fast path and bf16 target streaming.
    """
    if inputs.shape != targets.shape:
        raise ValueError("inputs/targets shape mismatch")
    n = inputs.size
    if n == 0:
        raise ValueError("focal_loss: empty input")

    num_cores_hw, vmem_cap = _tpu_defaults()

    p_dt = _slab_dtype(inputs.dtype)
    # Binary {0,1} targets are exact in bf16 -> stream them as bf16.
    t_dt = jnp.bfloat16 if binary_targets else _slab_dtype(targets.dtype)

    # Sublane granularity: 16 for packed 16-bit slabs, 8 for f32.
    sub = 16 if (p_dt == jnp.bfloat16 or t_dt == jnp.bfloat16) else SUBLANE
    chunk = sub * LANE
    padded_n = ((n + chunk - 1) // chunk) * chunk
    pad = padded_n - n              # < chunk; zero for typical NCHW sizes
    rows = padded_n // LANE         # multiple of `sub`

    p2 = _slab(inputs, pad, p_dt)
    t2 = _slab(targets, pad, t_dt)

    cap = max(sub, (int(tile_rows_cap) // sub) * sub)
    tile_rows = min(rows, cap)                      # 8192 rows -> 4 MiB f32 / input block
    blocks_total = pl.cdiv(rows, tile_rows)
    num_cores = num_cores_hw if blocks_total >= num_cores_hw else 1
    blocks_per_core = pl.cdiv(blocks_total, num_cores)
    needs_mask = (num_cores * blocks_per_core * tile_rows) != rows

    # VMEM budget: both inputs, double-buffered, plus headroom for the resident
    # output block and compiler-internal scratch; clamped against the physical
    # capacity (v7x has only 64 MiB per TC, so always leave ~25% free).
    in_block_bytes = 2 * tile_rows * LANE * (
        jnp.dtype(p_dt).itemsize + jnp.dtype(t_dt).itemsize)
    vmem_limit = max(32 << 20, in_block_bytes + (16 << 20))
    if vmem_cap:
        vmem_limit = min(vmem_limit, vmem_cap - vmem_cap // 4)
    vmem_limit = int(min(vmem_limit, 48 << 20))

    def data_map(c, i):
        # Clamp so the DMA never targets a fully out-of-range block; the
        # in-kernel mask (based on the *logical* index) zeroes any duplicate.
        blk = jnp.minimum(c * blocks_per_core + i, blocks_total - 1)
        return (blk, 0)

    kernel = functools.partial(
        _focal_kernel,
        alpha=float(alpha), gamma=float(gamma), tile_rows=tile_rows,
        blocks_per_core=blocks_per_core, valid_rows=rows,
        needs_mask=needs_mask, binary_targets=bool(binary_targets))

    partials = pl.pallas_call(
        kernel,
        out_shape=jax.ShapeDtypeStruct((num_cores * SUBLANE, LANE), jnp.float32),
        grid_spec=pltpu.PrefetchScalarGridSpec(
            num_scalar_prefetch=0,
            grid=(num_cores, blocks_per_core),
            in_specs=[
                pl.BlockSpec((tile_rows, LANE), data_map),
                pl.BlockSpec((tile_rows, LANE), data_map),
            ],
            out_specs=pl.BlockSpec((SUBLANE, LANE), lambda c, i: (c, 0)),
        ),
        compiler_params=pltpu.CompilerParams(
            # On v7x, verify with xprof that the first axis actually shards
            # across both TensorCores; if not, switch it to pltpu.CORE_PARALLEL.
            dimension_semantics=("parallel", "arbitrary"),
            vmem_limit_bytes=vmem_limit,
        ),
    )(p2, t2)

    # One tiny cross-lane reduction of the (num_cores*8, 128) partial sums.
    return (jnp.sum(partials) / n).astype(jnp.float32)


def focal_loss_ref(inputs, targets, alpha=1.0, gamma=2.0):
    """Pure-JAX reference mirroring the PyTorch module."""
    p = inputs.astype(jnp.float32)
    t = targets.astype(jnp.float32)
    log_p = jnp.maximum(jnp.log(p), -100.0)
    log_1mp = jnp.maximum(jnp.log(1.0 - p), -100.0)
    bce = -(t * log_p + (1.0 - t) * log_1mp)
    pt = jnp.exp(-bce)
    return jnp.mean(alpha * (1.0 - pt) ** gamma * bce)


if __name__ == "__main__":
    key = jax.random.PRNGKey(0)
    k1, k2, k3, k4, k5 = jax.random.split(key, 5)

    # 1) Primary: NCHW probability map + binary targets (fast path, bf16 targets).
    x = jax.nn.sigmoid(jax.random.normal(k1, (2, 4, 16, 16), dtype=jnp.float32))
    y = (jax.random.uniform(k2, (2, 4, 16, 16)) > 0.5).astype(jnp.float32)
    out = jax.block_until_ready(focal_loss(x, y, alpha=1.0, gamma=2.0, binary_targets=True))
    ref = focal_loss_ref(x, y, alpha=1.0, gamma=2.0)
    assert jnp.allclose(out, ref, rtol=1e-5, atol=2e-6), (out, ref)

    # 2) Ragged element count (zero-loss tail pad + true-n mean), fast path.
    x2 = jax.nn.sigmoid(jax.random.normal(k3, (2, 3, 11, 13), dtype=jnp.float32))
    y2 = (jax.random.uniform(k4, (2, 3, 11, 13)) > 0.5).astype(jnp.float32)
    out2 = jax.block_until_ready(focal_loss(x2, y2, binary_targets=True))
    ref2 = focal_loss_ref(x2, y2)
    assert jnp.allclose(out2, ref2, rtol=1e-5, atol=2e-6), (out2, ref2)

    # 3) Soft targets -> general exp(-BCE) path (exact module semantics).
    x3 = jax.nn.sigmoid(jax.random.normal(k1, (2, 4, 16, 16), dtype=jnp.float32))
    y3 = jax.random.uniform(k5, (2, 4, 16, 16), dtype=jnp.float32)
    out3 = jax.block_until_ready(focal_loss(x3, y3))
    ref3 = focal_loss_ref(x3, y3)
    assert jnp.allclose(out3, ref3, rtol=1e-5, atol=1e-6), (out3, ref3)

    # 4) Multi-block accumulation + partial-last-block mask, general path
    #    (tiny tile cap just to exercise the masking logic at a small size).
    x4 = jax.nn.sigmoid(jax.random.normal(k2, (3, 4, 16, 16), dtype=jnp.float32))
    y4 = jax.random.uniform(k3, (3, 4, 16, 16), dtype=jnp.float32)
    out4 = jax.block_until_ready(focal_loss(x4, y4, tile_rows_cap=16))
    ref4 = focal_loss_ref(x4, y4)
    assert jnp.allclose(out4, ref4, rtol=1e-5, atol=1e-6), (out4, ref4)

    # 5) Multi-block + partial-last-block mask on the binary fast path (bf16 targets).
    x5 = jax.nn.sigmoid(jax.random.normal(k4, (3, 16, 128), dtype=jnp.float32))
    y5 = (jax.random.uniform(k5, (3, 16, 128)) > 0.5).astype(jnp.float32)
    out5 = jax.block_until_ready(focal_loss(x5, y5, binary_targets=True, tile_rows_cap=32))
    ref5 = focal_loss_ref(x5, y5)
    assert jnp.allclose(out5, ref5, rtol=1e-5, atol=2e-6), (out5, ref5)

    print("KERNEL_OK")
</pallas_src>

<mosaic_0001>
module attributes {stable_mosaic.version = 11 : i64} {
  func.func @_focal_kernel(%arg0: i32, %arg1: i32, %arg2: memref<16x128xf32, #tpu.memory_space<vmem>>, %arg3: memref<16x128xbf16, #tpu.memory_space<vmem>>, %arg4: memref<8x128xf32, #tpu.memory_space<vmem>>) attributes {dimension_semantics = [#tpu.dimension_semantics<parallel>, #tpu.dimension_semantics<arbitrary>], iteration_bounds = array<i64: 1, 1>, scalar_prefetch = 0 : i64, scratch_operands = 0 : i64, tpu.core_type = #tpu.core_type<tc>, window_params = [{transform_indices = @transform_0, window_bounds = array<i64: 16, 128>}, {transform_indices = @transform_1, window_bounds = array<i64: 16, 128>}, {transform_indices = @transform_2, window_bounds = array<i64: 8, 128>}]} {
    %c0_i32 = arith.constant 0 : i32
    %0 = arith.cmpi eq, %arg1, %c0_i32 : i32
    %1 = arith.extui %0 : i1 to i32
    %c0_i32_0 = arith.constant 0 : i32
    %2 = arith.cmpi ne, %1, %c0_i32_0 : i32
    scf.if %2 {
      %cst_13 = arith.constant 0.000000e+00 : f32
      %25 = vector.broadcast %cst_13 : f32 to vector<8x128xf32>
      %c0_14 = arith.constant 0 : index
      %c0_15 = arith.constant 0 : index
      %26 = vector.load %arg4[%c0_14, %c0_15] : memref<8x128xf32, #tpu.memory_space<vmem>>, vector<8x128xf32>
      tpu.vector_store %arg4[%c0_14, %c0_15], %25 {strides = array<i32>} : memref<8x128xf32, #tpu.memory_space<vmem>>, vector<8x128xf32>,
    } else {
    }
    %c0 = arith.constant 0 : index
    %c0_1 = arith.constant 0 : index
    %3 = vector.load %arg2[%c0, %c0_1] : memref<16x128xf32, #tpu.memory_space<vmem>>, vector<16x128xf32>
    %c0_2 = arith.constant 0 : index
    %c0_3 = arith.constant 0 : index
    %4 = vector.load %arg3[%c0_2, %c0_3] : memref<16x128xbf16, #tpu.memory_space<vmem>>, vector<16x128xbf16>
    %5 = arith.extf %4 : vector<16x128xbf16> to vector<16x128xf32>
    %cst = arith.constant 1.000000e+00 : f32
    %6 = vector.broadcast %cst : f32 to vector<16x128xf32>
    %7 = arith.cmpf oeq, %5, %6 : vector<16x128xf32>
    %cst_4 = arith.constant 1.000000e+00 : f32
    %8 = vector.broadcast %cst_4 : f32 to vector<16x128xf32>
    %9 = arith.subf %8, %3 : vector<16x128xf32>
    %10 = arith.select %7, %3, %9 : vector<16x128xi1>, vector<16x128xf32>
    %11 = math.log %10 : vector<16x128xf32>
    %cst_5 = arith.constant -1.000000e+02 : f32
    %12 = vector.broadcast %cst_5 : f32 to vector<16x128xf32>
    %13 = arith.maximumf %11, %12 : vector<16x128xf32>
    %cst_6 = arith.constant 0.000000e+00 : f32
    %14 = vector.broadcast %cst_6 : f32 to vector<16x128xf32>
    %15 = arith.subf %14, %13 : vector<16x128xf32>
    %cst_7 = arith.constant 1.000000e+00 : f32
    %16 = vector.broadcast %cst_7 : f32 to vector<16x128xf32>
    %17 = arith.subf %16, %10 : vector<16x128xf32>
    %18 = arith.mulf %17, %17 : vector<16x128xf32>
    %19 = arith.mulf %18, %15 : vector<16x128xf32>
    %20 = vector.shape_cast %19 : vector<16x128xf32> to vector<2x8x128xf32>
    %cst_8 = arith.constant dense<0.000000e+00> : vector<8x128xf32>
    %21 = vector.multi_reduction <add>, %20, %cst_8 [0] : vector<2x8x128xf32> to vector<8x128xf32>
    %c0_9 = arith.constant 0 : index
    %c0_10 = arith.constant 0 : index
    %22 = vector.load %arg4[%c0_9, %c0_10] : memref<8x128xf32, #tpu.memory_space<vmem>>, vector<8x128xf32>
    %23 = arith.addf %22, %21 : vector<8x128xf32>
    %c0_11 = arith.constant 0 : index
    %c0_12 = arith.constant 0 : index
    %24 = vector.load %arg4[%c0_11, %c0_12] : memref<8x128xf32, #tpu.memory_space<vmem>>, vector<8x128xf32>
    tpu.vector_store %arg4[%c0_11, %c0_12], %23 {strides = array<i32>} : memref<8x128xf32, #tpu.memory_space<vmem>>, vector<8x128xf32>,
    return
  }
  func.func @transform_0(%arg0: i32, %arg1: i32) -> (i32, i32) {
    %c1_i32 = arith.constant 1 : i32
    %0 = arith.muli %arg0, %c1_i32 : i32
    %1 = arith.addi %0, %arg1 : i32
    %c0_i32 = arith.constant 0 : i32
    %2 = arith.minsi %1, %c0_i32 : i32
    %c0_i32_0 = arith.constant 0 : i32
    %c0_i32_1 = arith.constant 0 : i32
    return %2, %c0_i32_0 : i32, i32
  }
  func.func @transform_1(%arg0: i32, %arg1: i32) -> (i32, i32) {
    %c1_i32 = arith.constant 1 : i32
    %0 = arith.muli %arg0, %c1_i32 : i32
    %1 = arith.addi %0, %arg1 : i32
    %c0_i32 = arith.constant 0 : i32
    %2 = arith.minsi %1, %c0_i32 : i32
    %c0_i32_0 = arith.constant 0 : i32
    %c0_i32_1 = arith.constant 0 : i32
    return %2, %c0_i32_0 : i32, i32
  }
  func.func @transform_2(%arg0: i32, %arg1: i32) -> (i32, i32) {
    %c0_i32 = arith.constant 0 : i32
    %c0_i32_0 = arith.constant 0 : i32
    return %arg0, %c0_i32 : i32, i32
  }
}

</mosaic_0001>

<llo_original>
// kernel: tpu_custom_call.1
$region0: #{tpu_custom_call.1}
  #allocation0 [shape = 'u32[]', space=smem, size = 0x4, offset = 0x4, fixed_abs, tag = 'smem constant byte address 0x4 - core index']
  #allocation1 [shape = 'u32[144,128]{1,0:T(1,128)}', space=vmem, size = 0x12000, scoped, tag = 'internal scratch']
  %s0 = inlined_call_operand.hbm [shape: f32[16,128], index: 0, kind: input, shape index: {}]
  %s1 = inlined_call_operand.hbm [shape: bf16[16,128], index: 1, kind: input, shape index: {}]
  %s2 = inlined_call_operand.hbm [shape: f32[8,128], index: 2, kind: output, shape index: {}]
  %s3 = sld [smem:[#allocation0]]
  $region30: #{tpu_custom_call.1} parent=0
    _
  %s5 = ssub.s32 1, %s3
  %s6 = scalar_select 0, %s5, %s3
  $region1: #{tpu_custom_call.1} parent=0
    #allocation2 [shape = 'u8[8192]{0}', space=vmem, size = 0x2000, scoped, tag = 'input window, operand 0, single buffered']
    #allocation3 [shape = 's32[1]{0}', space=sflag, size = 0x4, scoped, tag = 'scoped memory for tpu_custom_call.1']
    #allocation4 [shape = 's32[1]{0}', space=sflag, size = 0x4, scoped, tag = 'scoped memory for tpu_custom_call.1']
    #allocation5 [shape = 'u8[4096]{0}', space=vmem, size = 0x1000, scoped, tag = 'input window, operand 1, single buffered']
    #allocation6 [shape = 's32[1]{0}', space=sflag, size = 0x4, scoped, tag = 'scoped memory for tpu_custom_call.1']
    #allocation7 [shape = 'u8[4096]{0}', space=vmem, size = 0x1000, scoped, tag = 'output window, operand 0, single buffered']
    %7 = vsyncpa [#allocation3], 0
    %8 = vsyncpa [#allocation6], 0
    %9 = vsyncpa [#allocation4], 0
    // Predicated region
    $region2: #{tpu_custom_call.1} parent=1 // pred_check
      _
    $region3: #{tpu_custom_call.1} parent=1 // pred_check_branch
      %11 = sbr.rel (0) target = $region5
    $region4: #{tpu_custom_call.1} parent=1 // pred_region
      %s12 = sadd.s32 0, 0
      %p13 = scmp.lt.s32.totalorder %s12, 0
      %s14 = scalar_select %p13, %s12, 0
      %s15 = smul.u32 2, %s14
      %s17 = ssub.s32 256, 256
      %18 = vsyncadd [#allocation3], %s17
      %s19 = smul.addr %s15, 128
      %s20 = scalar_lea.hbm %s0, %s19
      %s21 = sshll.u32 [#allocation2], 4
      %s22 = int_to_ptr.vmem [resolvable:$true] %s21
      %27 = dma.hbm_to_vmem [thread:$0]  %s20, 256, %s22, [#allocation3], 128, 128, 8
    $region5: #{tpu_custom_call.1} parent=1 // pred_fallthru
      _
    // Predicated region
    $region6: #{tpu_custom_call.1} parent=1 // pred_check
      _
    $region7: #{tpu_custom_call.1} parent=1 // pred_check_branch
      %29 = sbr.rel (0) target = $region9
    $region8: #{tpu_custom_call.1} parent=1 // pred_region
      %s30 = sadd.s32 0, 0
      %p31 = scmp.lt.s32.totalorder %s30, 0
      %s32 = scalar_select %p31, %s30, 0
      %s33 = smul.u32 2, %s32
      %s35 = ssub.s32 128, 128
      %36 = vsyncadd [#allocation6], %s35
      %s37 = smul.addr %s33, 64
      %s38 = scalar_lea.hbm %s1, %s37
      %s39 = sshll.u32 [#allocation5], 4
      %s40 = int_to_ptr.vmem [resolvable:$true] %s39
      %45 = dma.hbm_to_vmem [thread:$0]  %s38, 128, %s40, [#allocation6], 64, 64, 4
    $region9: #{tpu_custom_call.1} parent=1 // pred_fallthru
      _
    // Predicated region
    $region10: #{tpu_custom_call.1} parent=1 // pred_check
      _
    $region11: #{tpu_custom_call.1} parent=1 // pred_check_branch
      %47 = sbr.rel (0) target = $region13
    $region12: #{tpu_custom_call.1} parent=1 // pred_region
      %48 = dma.done [#allocation3], 256
    $region13: #{tpu_custom_call.1} parent=1 // pred_fallthru
      _
    // Predicated region
    $region14: #{tpu_custom_call.1} parent=1 // pred_check
      _
    $region15: #{tpu_custom_call.1} parent=1 // pred_check_branch
      %50 = sbr.rel (0) target = $region17
    $region16: #{tpu_custom_call.1} parent=1 // pred_region
      %51 = dma.done [#allocation6], 128
    $region17: #{tpu_custom_call.1} parent=1 // pred_fallthru
      _
    %s52 = sadd.s32 0, 0
    %p53 = scmp.lt.s32.totalorder %s52, 0
    %s54 = scalar_select %p53, %s52, 0
    %s55 = smul.u32 2, %s54
    %s56 = sadd.s32 0, 0
    %p57 = scmp.lt.s32.totalorder %s56, 0
    %s58 = scalar_select %p57, %s56, 0
    %s59 = smul.u32 2, %s58
    %p60 = scmp.eq.s32.totalorder 0, 0
    // Predicated region
    $region18: #{tpu_custom_call.1} parent=1 // pred_check
      %p61 = pneg %p60
    $region19: #{tpu_custom_call.1} parent=1 // pred_check_branch
      %63 = sbr.rel (%p61) target = $region21
    $region20: #{tpu_custom_call.1} parent=1 // pred_region
      %64 = vst [vmem:[#allocation7] sm:$0xff] 0.0
    $region21: #{tpu_custom_call.1} parent=1 // pred_fallthru
      _
    %v65 = vld [vmem:[#allocation2] sm:$0xff]
    %v66 = vld [vmem:[#allocation2 + $0x8] sm:$0xff]
    %v67 = vld [vmem:[#allocation5] sm:$0xf]
    %v68 = vld [vmem:[#allocation5 + $0x4] sm:$0xf]
    %v69 = vunpack.c.l.bf16 %v67
    %v70 = vunpack.c.l.bf16 %v68
    %vm71 = vcmp.eq.f32.partialorder %v69, 1.0
    %vm72 = vcmp.eq.f32.partialorder %v70, 1.0
    %v73 = vsub.f32 1.0, %v65
    %v74 = vsub.f32 1.0, %v66
    %v75 = vsel %vm71, %v65, %v73
    %v76 = vsel %vm72, %v66, %v74
    %v77 = vlog2.pop %v75
    %v78 = vmul.f32 %v77, 0.6931472
    %v79 = vlog2.pop %v76
    %v80 = vmul.f32 %v79, 0.6931472
    %v81 = vmax.f32 %v78, -100.0
    %v82 = vmax.f32 %v80, -100.0
    %v83 = vsub.f32 0.0, %v81
    %v84 = vsub.f32 0.0, %v82
    %v85 = vsub.f32 1.0, %v75
    %v86 = vsub.f32 1.0, %v76
    %v87 = vmul.f32 %v85, %v85
    %v88 = vmul.f32 %v86, %v86
    %v89 = vmul.f32 %v87, %v83
    %v90 = vmul.f32 %v88, %v84
    %v91 = vadd.f32 %v89, %v90
    %v92 = vld [vmem:[#allocation7] sm:$0xff]
    %v93 = vadd.f32 %v92, %v91
    %94 = vst [vmem:[#allocation7] sm:$0xff] %v93
    // Predicated region
    $region22: #{tpu_custom_call.1} parent=1 // pred_check
      _
    $region23: #{tpu_custom_call.1} parent=1 // pred_check_branch
      %96 = sbr.rel (0) target = $region25
    $region24: #{tpu_custom_call.1} parent=1 // pred_region
      %s98 = ssub.s32 128, 128
      %99 = vsyncadd [#allocation4], %s98
      %s101 = sshll.u32 [#allocation7], 4
      %s102 = int_to_ptr.vmem [resolvable:$true] %s101
      %104 = dma.vmem_to_hbm [thread:$0]  %s102, 128, %s2, [#allocation4]
    $region25: #{tpu_custom_call.1} parent=1 // pred_fallthru
      _
    // Predicated region
    $region26: #{tpu_custom_call.1} parent=1 // pred_check
      _
    $region27: #{tpu_custom_call.1} parent=1 // pred_check_branch
      %106 = sbr.rel (0) target = $region29
    $region28: #{tpu_custom_call.1} parent=1 // pred_region
      %107 = dma.done [#allocation4], 128
    $region29: #{tpu_custom_call.1} parent=1 // pred_fallthru
      _
    %108 = vsyncpa [#allocation3], 1
    %109 = vsyncpa [#allocation6], 1
    %110 = vsyncpa [#allocation4], 1

</llo_original>
